<compile_context>
chip_gen: v5e
topology: v5e:2x2
jax: 0.10.0
libtpu: 0.0.40
codegen_flags: <defaults>
</compile_context>

<pallas_src>
import functools

import jax
import jax.numpy as jnp
from jax import lax
from jax.experimental import pallas as pl
from jax.experimental.pallas import tpu as pltpu

# Rs conventions as in se3cnn: Rs_in = [(multiplicity, l)], Rs_gn = [(m, 2l+1)]
RS_IN = [(2, 0), (2, 1)]
RS_GN = tuple((m, 2 * l + 1) for m, l in RS_IN)     # ((2, 1), (2, 3))
RS_OUT = [(2, 0), (2, 1)]
SIZE = 3
EPS = 1e-5

C_IN = sum(m * d for m, d in RS_GN)                 # 8
C_OUT = sum(m * (2 * l + 1) for m, l in RS_OUT)     # 8


# ---------------------------------------------------------------------------
# pltpu.roll convention probe (cached, one tiny pallas_call at setup time).
# We need "shift LEFT by off" copies of the activation; probing which static
# shift achieves that makes the kernel correct for either roll sign convention.
# ---------------------------------------------------------------------------
def _roll_probe_kernel(x_ref, o_ref):
    o_ref[...] = pltpu.roll(x_ref[...], 1, axis=1)


@functools.lru_cache(maxsize=1)
def _roll_matches_jnp():
    x = jnp.tile(jnp.arange(128, dtype=jnp.float32), (8, 1))
    out = pl.pallas_call(
        _roll_probe_kernel,
        out_shape=jax.ShapeDtypeStruct((8, 128), jnp.float32),
    )(x)
    # jnp.roll(row, 1) puts row[-1] (=127) at position 0.
    return bool(out[0, 0] == 127.0)


# ---------------------------------------------------------------------------
# Fused GroupNorm + single-dot implicit-GEMM conv (one batch element per step)
# ---------------------------------------------------------------------------
def _fused_gn_conv_kernel(gn_w_ref, gn_b_ref, x_ref, w_ref, o_ref, taps_ref,
                          *, rs, eps, shifts):
    # x_ref   : (1, C_in, S)   f32 block, S = X*Y*Z flat on the lane axis
    # w_ref   : (C_out, K)     conv weights, K = k^3*C_in, tap-major layout
    # o_ref   : (1, C_out, SP) lane-dense valid-prefix output (SP % 128 == 0)
    # taps_ref: (K, SP)        VMEM scratch holding the k^3 lane-shifted copies
    C = x_ref.shape[1]
    S = x_ref.shape[2]
    SP = o_ref.shape[2]

    x = x_ref[0].astype(jnp.float32)                      # (C, S)

    # ---- GroupNorm: one-pass stats, per-channel scale/shift columns --------
    ch = lax.broadcasted_iota(jnp.int32, (C, 1), 0)       # channel index column
    scale_col = jnp.zeros((C, 1), jnp.float32)
    shift_col = jnp.zeros((C, 1), jnp.float32)

    ix, iw, ib = 0, 0, 0
    for m, d in rs:                                        # static unroll
        f = x[ix:ix + m * d, :]                            # (m*d, S)
        denom = float(m * S)
        ex2 = jnp.sum(f * f) / denom                       # E over (m, S) of sum_d f^2
        if d == 1:
            mean = jnp.sum(f) / denom                      # mean over (m, S)
            norm = ex2 - mean * mean                       # = E[(f - mean)^2]
        else:
            norm = ex2
        scale = lax.rsqrt(norm + eps)
        for i in range(m):
            s_i = scale * gn_w_ref[iw + i]                 # per-multiplicity affine
            lo, hi = ix + i * d, ix + (i + 1) * d
            sel = (ch >= lo) & (ch < hi)
            scale_col = jnp.where(sel, s_i, scale_col)
            if d == 1:
                shift_col = jnp.where(sel, gn_b_ref[ib + i] - mean * s_i,
                                      shift_col)
        iw += m
        if d == 1:
            ib += m
        ix += m * d

    y = x * scale_col + shift_col                          # single vectorized apply

    # ---- Implicit GEMM, all taps fused: one (C_out, K) @ (K, SP) dot -------
    # Stage the k^3 lane-rolled copies of y.  Wrapped values only reach output
    # columns that the wrapper discards (proved: valid s + off <= S - 1).
    for t, shift in enumerate(shifts):                     # static unroll, k^3 taps
        yt = y if shift == 0 else pltpu.roll(y, shift, axis=1)   # XLU rotation
        taps_ref[t * C:(t + 1) * C, :] = yt[:, :SP]        # aligned slice + store

    acc = jnp.dot(w_ref[...], taps_ref[...],
                  preferred_element_type=jnp.float32)      # single deep MXU pass
    o_ref[0] = acc.astype(o_ref.dtype)                     # unmasked lane-dense store


def se3_gn_convolution(x, gn_weight, gn_bias, conv_w, *, rs=RS_GN, eps=EPS):
    # x: [B, C_in, X, Y, Z] (PyTorch NCDHW convention); VALID conv, stride 1.
    B, C, X, Y, Z = x.shape
    C_out, C_in, k, _, _ = conv_w.shape
    assert C == C_in
    S = X * Y * Z
    Ox, Oy, Oz = X - k + 1, Y - k + 1, Z - k + 1
    k3 = k ** 3
    K = k3 * C_in

    # All valid flat outputs s = ox*Y*Z + oy*Z + oz lie in [0, n_valid).
    n_valid = Ox * Y * Z
    max_off = (k - 1) * (Y * Z + Z + 1)
    last_valid = (Ox - 1) * Y * Z + (Oy - 1) * Z + (Oz - 1)
    assert last_valid == S - max_off - 1 and last_valid < n_valid
    SP = pl.cdiv(n_valid, 128) * 128           # lane-dense output width
    assert n_valid <= SP <= S

    x_flat = x.reshape(B, C, S).astype(jnp.float32)
    # (C_out, C_in, kx, ky, kz) -> (C_out, K); K index = ((kx*k+ky)*k+kz)*C_in + c_in
    w_flat = conv_w.astype(jnp.float32).transpose(0, 2, 3, 4, 1).reshape(C_out, K)

    # Static tap offsets, expressed as pltpu.roll shifts that realize a LEFT
    # shift by `off` under the installed roll convention.
    offs = tuple(kx * Y * Z + ky * Z + kz
                 for kx in range(k) for ky in range(k) for kz in range(k))
    if _roll_matches_jnp():
        shifts = tuple((S - off) % S for off in offs)
    else:
        shifts = offs

    kernel = functools.partial(_fused_gn_conv_kernel, rs=tuple(rs), eps=eps,
                               shifts=shifts)

    cost = pl.CostEstimate(
        flops=2 * B * C_out * K * SP,
        transcendentals=B * len(rs),
        bytes_accessed=(x_flat.size + w_flat.size + B * C_out * SP) * 4,
    )

    out_flat = pl.pallas_call(
        kernel,
        out_shape=jax.ShapeDtypeStruct((B, C_out, SP), jnp.float32),
        grid=(B,),
        in_specs=[
            pl.BlockSpec(memory_space=pltpu.SMEM),                # gn weight (scalars)
            pl.BlockSpec(memory_space=pltpu.SMEM),                # gn bias   (scalars)
            pl.BlockSpec((1, C, S), lambda b: (b, 0, 0)),         # x[b]
            pl.BlockSpec((C_out, K), lambda b: (0, 0)),           # weights, resident
        ],
        out_specs=pl.BlockSpec((1, C_out, SP), lambda b: (b, 0, 0)),
        scratch_shapes=[pltpu.VMEM((K, SP), jnp.float32)],        # stacked taps
        compiler_params=pltpu.CompilerParams(
            dimension_semantics=("parallel",),
            vmem_limit_bytes=48 * 1024 * 1024,   # headroom on v7x (64 MiB / TC)
        ),
        cost_estimate=cost,
    )(gn_weight.astype(jnp.float32), gn_bias.astype(jnp.float32), x_flat, w_flat)

    # Keep only the VALID output positions.
    out = out_flat[:, :, :n_valid].reshape(B, C_out, Ox, Y, Z)[:, :, :, :Oy, :Oz]
    return out


# ---------------------------------------------------------------------------
# Pure-JAX reference (mirrors the PyTorch forward) for validation
# ---------------------------------------------------------------------------
def _gn_reference(x_flat, weight, bias, rs, eps):
    B = x_flat.shape[0]
    outs, ix, iw, ib = [], 0, 0, 0
    for m, d in rs:
        f = x_flat[:, ix:ix + m * d, :].reshape(B, m, d, -1)
        ix += m * d
        if d == 1:
            mean = f.reshape(B, -1).mean(-1)
            f = f - mean.reshape(-1, 1, 1, 1)
        norm = jnp.sum(f ** 2, axis=2).reshape(B, -1).mean(-1)
        norm = lax.rsqrt(norm + eps).reshape(-1, 1, 1, 1)
        norm = norm * weight[iw:iw + m].reshape(1, -1, 1, 1)
        iw += m
        f = f * norm
        if d == 1:
            f = f + bias[ib:ib + m].reshape(1, -1, 1, 1)
            ib += m
        outs.append(f.reshape(B, m * d, -1))
    return jnp.concatenate(outs, axis=1)


def _reference(x, gn_weight, gn_bias, conv_w):
    B, C, X, Y, Z = x.shape
    y = _gn_reference(x.reshape(B, C, -1), gn_weight, gn_bias, RS_GN, EPS)
    y = y.reshape(B, C, X, Y, Z)
    return lax.conv_general_dilated(
        y, conv_w, window_strides=(1, 1, 1), padding="VALID",
        dimension_numbers=("NCDHW", "OIDHW", "NCDHW"))


if __name__ == "__main__":
    key = jax.random.PRNGKey(0)
    k1, k2, k3_, k4 = jax.random.split(key, 4)

    B, X = 2, 8
    x = jax.random.normal(k1, (B, C_IN, X, X, X), dtype=jnp.float32)

    # SE3GroupNorm affine params (module init is ones/zeros; perturb slightly so
    # the affine path is actually exercised by the check).
    n_w = sum(m for m, d in RS_GN)
    n_b = sum(m for m, d in RS_GN if d == 1)
    gn_weight = jnp.ones((n_w,), jnp.float32) + 0.1 * jax.random.normal(k3_, (n_w,), jnp.float32)
    gn_bias = 0.1 * jax.random.normal(k4, (n_b,), jnp.float32)
    # Synthetic effective SE3Convolution kernel (deterministic).
    conv_w = 0.1 * jax.random.normal(k2, (C_OUT, C_IN, SIZE, SIZE, SIZE), jnp.float32)

    out = se3_gn_convolution(x, gn_weight, gn_bias, conv_w)
    out = jax.block_until_ready(out)

    ref = _reference(x, gn_weight, gn_bias, conv_w)
    assert out.shape == ref.shape, (out.shape, ref.shape)
    err = float(jnp.max(jnp.abs(out - ref)))
    assert jnp.allclose(out, ref, atol=1e-4, rtol=1e-4), err

    print("KERNEL_OK")
</pallas_src>

<mosaic_0001>
module attributes {stable_mosaic.version = 11 : i64} {
  func.func @_roll_probe_kernel(%arg0: memref<8x128xf32, #tpu.memory_space<vmem>>, %arg1: memref<8x128xf32, #tpu.memory_space<vmem>>) attributes {dimension_semantics = [], scalar_prefetch = 0 : i64, scratch_operands = 0 : i64, tpu.core_type = #tpu.core_type<tc>} {
    %c0 = arith.constant 0 : index
    %c0_0 = arith.constant 0 : index
    %0 = vector.load %arg0[%c0, %c0_0] : memref<8x128xf32, #tpu.memory_space<vmem>>, vector<8x128xf32>
    %c1_i32 = arith.constant 1 : i32
    %1 = tpu.dynamic_rotate %0 by %c1_i32 dim 1 : vector<8x128xf32>, i32 -> vector<8x128xf32>
    %c0_1 = arith.constant 0 : index
    %c0_2 = arith.constant 0 : index
    %2 = vector.load %arg1[%c0_1, %c0_2] : memref<8x128xf32, #tpu.memory_space<vmem>>, vector<8x128xf32>
    tpu.vector_store %arg1[%c0_1, %c0_2], %1 {strides = array<i32>} : memref<8x128xf32, #tpu.memory_space<vmem>>, vector<8x128xf32>,
    return
  }
}

</mosaic_0001>

<llo_original>
// kernel: tpu_custom_call.1
$region0: #{tpu_custom_call.1}
  #allocation0 [shape = 'u32[]', space=smem, size = 0x4, offset = 0x4, fixed_abs, tag = 'smem constant byte address 0x4 - core index']
  #allocation1 [shape = 'u32[72,128]{1,0:T(1,128)}', space=vmem, size = 0x9000, scoped, tag = 'internal scratch']
  %s0 = inlined_call_operand.hbm [shape: f32[8,128], index: 0, kind: input, shape index: {}]
  %s1 = inlined_call_operand.hbm [shape: f32[8,128], index: 1, kind: output, shape index: {}]
  %s2 = sld [smem:[#allocation0]]
  $region18: #{tpu_custom_call.1} parent=0
    _
  %s4 = ssub.s32 1, %s2
  %s5 = scalar_select 0, %s4, %s2
  $region1: #{tpu_custom_call.1} parent=0
    #allocation2 [shape = 'u8[4096]{0}', space=vmem, size = 0x1000, scoped, tag = 'input window, operand 0, single buffered']
    #allocation3 [shape = 's32[1]{0}', space=sflag, size = 0x4, scoped, tag = 'scoped memory for tpu_custom_call.1']
    #allocation4 [shape = 's32[1]{0}', space=sflag, size = 0x4, scoped, tag = 'scoped memory for tpu_custom_call.1']
    #allocation5 [shape = 'u8[4096]{0}', space=vmem, size = 0x1000, scoped, tag = 'output window, operand 0, single buffered']
    %6 = vsyncpa [#allocation3], 0
    %7 = vsyncpa [#allocation4], 0
    // Predicated region
    $region2: #{tpu_custom_call.1} parent=1 // pred_check
      _
    $region3: #{tpu_custom_call.1} parent=1 // pred_check_branch
      %9 = sbr.rel (0) target = $region5
    $region4: #{tpu_custom_call.1} parent=1 // pred_region
      %11 = vsyncadd [#allocation3], 0
      %s13 = sshll.u32 %s0, 4
      %s14 = int_to_ptr.hbm [resolvable:$true] %s13
      %s15 = sshll.u32 [#allocation2], 4
      %s16 = int_to_ptr.vmem [resolvable:$true] %s15
      %18 = dma.hbm_to_vmem [thread:$0]  %s14, 128, %s16, [#allocation3]
    $region5: #{tpu_custom_call.1} parent=1 // pred_fallthru
      _
    // Predicated region
    $region6: #{tpu_custom_call.1} parent=1 // pred_check
      _
    $region7: #{tpu_custom_call.1} parent=1 // pred_check_branch
      %20 = sbr.rel (0) target = $region9
    $region8: #{tpu_custom_call.1} parent=1 // pred_region
      %22 = dma.done [#allocation3], 128
    $region9: #{tpu_custom_call.1} parent=1 // pred_fallthru
      _
    %v23 = vld [vmem:[#allocation2] sm:$0xff]
    %24 = vrot.lane.b32.xlu0 %v23, 1
    %v25 = vpop.permute.xlu0 %24
    %26 = vst [vmem:[#allocation5] sm:$0xff] %v25
    // Predicated region
    $region10: #{tpu_custom_call.1} parent=1 // pred_check
      _
    $region11: #{tpu_custom_call.1} parent=1 // pred_check_branch
      %28 = sbr.rel (0) target = $region13
    $region12: #{tpu_custom_call.1} parent=1 // pred_region
      %30 = vsyncadd [#allocation4], 0
      %s32 = sshll.u32 [#allocation5], 4
      %s33 = int_to_ptr.vmem [resolvable:$true] %s32
      %s34 = sshll.u32 %s1, 4
      %s35 = int_to_ptr.hbm [resolvable:$true] %s34
      %37 = dma.vmem_to_hbm [thread:$0]  %s33, 128, %s35, [#allocation4]
    $region13: #{tpu_custom_call.1} parent=1 // pred_fallthru
      _
    // Predicated region
    $region14: #{tpu_custom_call.1} parent=1 // pred_check
      _
    $region15: #{tpu_custom_call.1} parent=1 // pred_check_branch
      %39 = sbr.rel (0) target = $region17
    $region16: #{tpu_custom_call.1} parent=1 // pred_region
      %41 = dma.done [#allocation4], 128
    $region17: #{tpu_custom_call.1} parent=1 // pred_fallthru
      _
    %42 = vsyncpa [#allocation3], 1
    %43 = vsyncpa [#allocation4], 1

</llo_original>
